<compile_context>
chip_gen: v5e
topology: v5e:2x2
jax: 0.10.0
libtpu: 0.0.40
codegen_flags: <defaults>
</compile_context>

<pallas_src>
import jax
import jax.numpy as jnp
from jax.experimental import pallas as pl
from jax.experimental.pallas import tpu as pltpu

B, C_IN, H, W = 2, 4, 16, 16     # input: (batch, channels, 16, 16) in NCHW
NUM_FTRS = 32                    # original_model.fc.in_features
NUM_CLASS = 8                    # original_model.fc.out_features
KH = KW = 3
HW = H * W                       # 256 output pixels per image
K_IM2COL = KH * KW * C_IN        # 36 = contraction depth of the conv-as-matmul
F_PAD = 128                      # conv out-channels padded to full lane width
C_PAD = 128                      # classifier outputs padded to full lane width


def divide_model_kernel(patches_ref, wconv_ref, bconv_ref, pool_ref,
                        wfc_ref, bfc_ref, o_ref):
    # patches_ref: (B*HW, K_IM2COL)  im2col rows, one per output pixel
    # wconv_ref:   (K_IM2COL, F_PAD) conv weights as a matrix, zero-padded lanes
    # bconv_ref:   (1, F_PAD)        conv bias, zero-padded
    # pool_ref:    (B, B*HW)         block-diagonal mean-pool operator (value 1/HW)
    # wfc_ref:     (F_PAD, C_PAD)    classifier weight, zero-padded both ways
    # bfc_ref:     (1, C_PAD)        classifier bias, zero-padded
    # o_ref:       (B, C_PAD)        lane-dense logits slab (sliced in wrapper)
    acc = jnp.dot(patches_ref[...], wconv_ref[...],
                  preferred_element_type=jnp.float32)          # conv as one matmul
    acc = jnp.maximum(acc + bconv_ref[...], 0.0)               # bias + ReLU
    pooled = jnp.dot(pool_ref[...], acc,
                     preferred_element_type=jnp.float32)       # global mean pool
    logits = jnp.dot(pooled, wfc_ref[...],
                     preferred_element_type=jnp.float32) + bfc_ref[...]
    o_ref[...] = logits.astype(o_ref.dtype)


def divide_model_forward(x_nchw, wconv, bconv, wfc, bfc):
    # --- layout plumbing (cheap XLA work, outside the kernel) ---
    x = jnp.transpose(x_nchw, (0, 2, 3, 1))                    # NCHW -> NHWC
    xp = jnp.pad(x, ((0, 0), (1, 1), (1, 1), (0, 0)))          # pad=1 for 3x3 conv

    # im2col: (B, H, W, KH*KW*C_IN) -> (B*HW, K_IM2COL); column order matches
    # wconv.reshape(KH*KW*C_IN, NUM_FTRS) flattening (kh-major, kw, c_in).
    cols = [xp[:, kh:kh + H, kw:kw + W, :]
            for kh in range(KH) for kw in range(KW)]
    patches = jnp.concatenate(cols, axis=-1).reshape(B * HW, K_IM2COL)

    wconv_mat = jnp.pad(wconv.reshape(K_IM2COL, NUM_FTRS),
                        ((0, 0), (0, F_PAD - NUM_FTRS)))
    bconv_p = jnp.pad(bconv, ((0, 0), (0, F_PAD - NUM_FTRS)))

    # Block-diagonal mean-pool operator with the 1/(H*W) scale folded in.
    row_batch = jnp.repeat(jnp.arange(B), HW)                  # (B*HW,)
    pool_mat = (jnp.arange(B)[:, None] == row_batch[None, :]
                ).astype(jnp.float32) / HW                     # (B, B*HW)

    wfc_p = jnp.pad(wfc, ((0, F_PAD - NUM_FTRS), (0, C_PAD - NUM_CLASS)))
    bfc_p = jnp.pad(bfc, ((0, 0), (0, C_PAD - NUM_CLASS)))

    # --- one kernel invocation, no grid, everything resident in VMEM (<0.5 MB) ---
    vmem = lambda: pl.BlockSpec(memory_space=pltpu.MemorySpace.VMEM)
    out_padded = pl.pallas_call(
        divide_model_kernel,
        out_shape=jax.ShapeDtypeStruct((B, C_PAD), jnp.float32),
        in_specs=[vmem() for _ in range(6)],
        out_specs=vmem(),
    )(patches, wconv_mat, bconv_p, pool_mat, wfc_p, bfc_p)

    return out_padded[:, :NUM_CLASS]                           # x.view(-1, num_class)


def reference_forward(x_nchw, wconv, bconv, wfc, bfc):
    # Pure-JAX reference of the same synthetic DivideModel.
    x = jnp.transpose(x_nchw, (0, 2, 3, 1))                    # NHWC
    y = jax.lax.conv_general_dilated(
        x, wconv, window_strides=(1, 1), padding="SAME",
        dimension_numbers=("NHWC", "HWIO", "NHWC"))
    y = jnp.maximum(y + bconv.reshape(1, 1, 1, -1), 0.0)
    pooled = jnp.mean(y, axis=(1, 2))                          # AdaptiveAvgPool2d(1)
    pooled = pooled.reshape(-1, NUM_FTRS)                      # x.view(-1, num_ftrs)
    logits = pooled @ wfc + bfc                                # Linear classifier
    return logits.reshape(-1, NUM_CLASS)                       # x.view(-1, num_class)


if __name__ == "__main__":
    key = jax.random.PRNGKey(0)
    kx, kwc, kbc, kwf, kbf = jax.random.split(key, 5)

    x = jax.random.normal(kx, (B, C_IN, H, W), dtype=jnp.float32)     # NCHW like PyTorch
    wconv = jax.random.normal(kwc, (KH, KW, C_IN, NUM_FTRS), dtype=jnp.float32) * 0.1
    bconv = jax.random.normal(kbc, (1, NUM_FTRS), dtype=jnp.float32) * 0.1
    wfc = jax.random.normal(kwf, (NUM_FTRS, NUM_CLASS), dtype=jnp.float32) * 0.1
    bfc = jax.random.normal(kbf, (1, NUM_CLASS), dtype=jnp.float32) * 0.1

    out = divide_model_forward(x, wconv, bconv, wfc, bfc)
    out = jax.block_until_ready(out)

    ref = reference_forward(x, wconv, bconv, wfc, bfc)
    assert out.shape == (B, NUM_CLASS)
    assert jnp.allclose(out, ref, atol=1e-4, rtol=1e-4), "mismatch vs JAX reference"

    print("KERNEL_OK")
</pallas_src>

<mosaic_0001>
module attributes {stable_mosaic.version = 11 : i64} {
  func.func @divide_model_kernel(%arg0: memref<512x36xf32, #tpu.memory_space<vmem>>, %arg1: memref<36x128xf32, #tpu.memory_space<vmem>>, %arg2: memref<1x128xf32, #tpu.memory_space<vmem>>, %arg3: memref<2x512xf32, #tpu.memory_space<vmem>>, %arg4: memref<128x128xf32, #tpu.memory_space<vmem>>, %arg5: memref<1x128xf32, #tpu.memory_space<vmem>>, %arg6: memref<2x128xf32, #tpu.memory_space<vmem>>) attributes {dimension_semantics = [], scalar_prefetch = 0 : i64, scratch_operands = 0 : i64, tpu.core_type = #tpu.core_type<tc>} {
    %c0 = arith.constant 0 : index
    %c0_0 = arith.constant 0 : index
    %0 = vector.load %arg0[%c0, %c0_0] : memref<512x36xf32, #tpu.memory_space<vmem>>, vector<512x36xf32>
    %c0_1 = arith.constant 0 : index
    %c0_2 = arith.constant 0 : index
    %1 = vector.load %arg1[%c0_1, %c0_2] : memref<36x128xf32, #tpu.memory_space<vmem>>, vector<36x128xf32>
    %cst = arith.constant dense<0.000000e+00> : vector<512x128xf32>
    %2 = tpu.matmul %0, %1, %cst {dimension_numbers = #tpu.dot_dimension_numbers<[1], [0], [0], [1], [0, 0, 1, 1], [], []>} : vector<512x36xf32>, vector<36x128xf32>, vector<512x128xf32> -> vector<512x128xf32>
    %c0_3 = arith.constant 0 : index
    %c0_4 = arith.constant 0 : index
    %3 = vector.load %arg2[%c0_3, %c0_4] : memref<1x128xf32, #tpu.memory_space<vmem>>, vector<1x128xf32>
    %4 = vector.broadcast %3 : vector<1x128xf32> to vector<512x128xf32>
    %5 = arith.addf %2, %4 : vector<512x128xf32>
    %cst_5 = arith.constant 0.000000e+00 : f32
    %6 = vector.broadcast %cst_5 : f32 to vector<512x128xf32>
    %7 = arith.maximumf %5, %6 : vector<512x128xf32>
    %c0_6 = arith.constant 0 : index
    %c0_7 = arith.constant 0 : index
    %8 = vector.load %arg3[%c0_6, %c0_7] : memref<2x512xf32, #tpu.memory_space<vmem>>, vector<2x512xf32>
    %cst_8 = arith.constant dense<0.000000e+00> : vector<2x128xf32>
    %9 = tpu.matmul %8, %7, %cst_8 {dimension_numbers = #tpu.dot_dimension_numbers<[1], [0], [0], [1], [0, 0, 1, 1], [], []>} : vector<2x512xf32>, vector<512x128xf32>, vector<2x128xf32> -> vector<2x128xf32>
    %c0_9 = arith.constant 0 : index
    %c0_10 = arith.constant 0 : index
    %10 = vector.load %arg4[%c0_9, %c0_10] : memref<128x128xf32, #tpu.memory_space<vmem>>, vector<128x128xf32>
    %cst_11 = arith.constant dense<0.000000e+00> : vector<2x128xf32>
    %11 = tpu.matmul %9, %10, %cst_11 {dimension_numbers = #tpu.dot_dimension_numbers<[1], [0], [0], [1], [0, 0, 1, 1], [], []>} : vector<2x128xf32>, vector<128x128xf32>, vector<2x128xf32> -> vector<2x128xf32>
    %c0_12 = arith.constant 0 : index
    %c0_13 = arith.constant 0 : index
    %12 = vector.load %arg5[%c0_12, %c0_13] : memref<1x128xf32, #tpu.memory_space<vmem>>, vector<1x128xf32>
    %13 = vector.broadcast %12 : vector<1x128xf32> to vector<2x128xf32>
    %14 = arith.addf %11, %13 : vector<2x128xf32>
    %c0_14 = arith.constant 0 : index
    %c0_15 = arith.constant 0 : index
    %15 = vector.load %arg6[%c0_14, %c0_15] : memref<2x128xf32, #tpu.memory_space<vmem>>, vector<2x128xf32>
    tpu.vector_store %arg6[%c0_14, %c0_15], %14 {strides = array<i32>} : memref<2x128xf32, #tpu.memory_space<vmem>>, vector<2x128xf32>,
    return
  }
}

</mosaic_0001>

<llo_original>
// kernel: tpu_custom_call.1
$region0: #{tpu_custom_call.1}
  #allocation0 [shape = 'u32[]', space=smem, size = 0x4, offset = 0x4, fixed_abs, tag = 'smem constant byte address 0x4 - core index']
  #allocation1 [shape = 'u32[72,128]{1,0:T(1,128)}', space=vmem, size = 0x9000, scoped, tag = 'internal scratch']
  %s0 = inlined_call_operand.vmem [shape: f32[512,36], index: 0, kind: input, shape index: {}]
  %s1 = inlined_call_operand.vmem [shape: f32[36,128], index: 1, kind: input, shape index: {}]
  %s2 = inlined_call_operand.vmem [shape: f32[1,128], index: 2, kind: input, shape index: {}]
  %s3 = inlined_call_operand.vmem [shape: f32[2,512], index: 3, kind: input, shape index: {}]
  %s4 = inlined_call_operand.vmem [shape: f32[128,128], index: 4, kind: input, shape index: {}]
  %s5 = inlined_call_operand.vmem [shape: f32[1,128], index: 5, kind: input, shape index: {}]
  %s6 = inlined_call_operand.hbm [shape: f32[2,128], index: 6, kind: output, shape index: {}]
  %s7 = sld [smem:[#allocation0]]
  $region34: #{tpu_custom_call.1} parent=0
    _
  %s9 = ssub.s32 1, %s7
  %s10 = scalar_select 0, %s9, %s7
  $region1: #{tpu_custom_call.1} parent=0
    #allocation2 [shape = 'u8[1024]{0}', space=vmem, size = 0x400, scoped, tag = 'output window, operand 0, single buffered']
    #allocation3 [shape = 's32[1]{0}', space=sflag, size = 0x4, scoped, tag = 'scoped memory for tpu_custom_call.1']
    %11 = vsyncpa [#allocation3], 0
    // Predicated region
    $region2: #{tpu_custom_call.1} parent=1 // pred_check
      _
    $region3: #{tpu_custom_call.1} parent=1 // pred_check_branch
      %13 = sbr.rel (0) target = $region5
    $region4: #{tpu_custom_call.1} parent=1 // pred_region
      _
    $region5: #{tpu_custom_call.1} parent=1 // pred_fallthru
      _
    // Predicated region
    $region6: #{tpu_custom_call.1} parent=1 // pred_check
      _
    $region7: #{tpu_custom_call.1} parent=1 // pred_check_branch
      %15 = sbr.rel (0) target = $region9
    $region8: #{tpu_custom_call.1} parent=1 // pred_region
      _
    $region9: #{tpu_custom_call.1} parent=1 // pred_fallthru
      _
    // Predicated region
    $region10: #{tpu_custom_call.1} parent=1 // pred_check
      _
    $region11: #{tpu_custom_call.1} parent=1 // pred_check_branch
      %17 = sbr.rel (0) target = $region13
    $region12: #{tpu_custom_call.1} parent=1 // pred_region
      _
    $region13: #{tpu_custom_call.1} parent=1 // pred_fallthru
      _
    // Predicated region
    $region14: #{tpu_custom_call.1} parent=1 // pred_check
      _
    $region15: #{tpu_custom_call.1} parent=1 // pred_check_branch
      %19 = sbr.rel (0) target = $region17
    $region16: #{tpu_custom_call.1} parent=1 // pred_region
      _
    $region17: #{tpu_custom_call.1} parent=1 // pred_fallthru
      _
    // Predicated region
    $region18: #{tpu_custom_call.1} parent=1 // pred_check
      _
    $region19: #{tpu_custom_call.1} parent=1 // pred_check_branch
      %21 = sbr.rel (0) target = $region21
    $region20: #{tpu_custom_call.1} parent=1 // pred_region
      _
    $region21: #{tpu_custom_call.1} parent=1 // pred_fallthru
      _
    // Predicated region
    $region22: #{tpu_custom_call.1} parent=1 // pred_check
      _
    $region23: #{tpu_custom_call.1} parent=1 // pred_check_branch
      %23 = sbr.rel (0) target = $region25
    $region24: #{tpu_custom_call.1} parent=1 // pred_region
      _
    $region25: #{tpu_custom_call.1} parent=1 // pred_fallthru
      _
    %v24 = vld [vmem:[%s0] sm:$0xff]
    %v25 = vld [vmem:[%s0 + $0x8] sm:$0xff]
    %v26 = vld [vmem:[%s0 + $0x10] sm:$0xff]
    %v27 = vld [vmem:[%s0 + $0x18] sm:$0xff]
    %v28 = vld [vmem:[%s0 + $0x20] sm:$0xff]
    %v29 = vld [vmem:[%s0 + $0x28] sm:$0xff]
    %v30 = vld [vmem:[%s0 + $0x30] sm:$0xff]
    %v31 = vld [vmem:[%s0 + $0x38] sm:$0xff]
    %v32 = vld [vmem:[%s0 + $0x40] sm:$0xff]
    %v33 = vld [vmem:[%s0 + $0x48] sm:$0xff]
    %v34 = vld [vmem:[%s0 + $0x50] sm:$0xff]
    %v35 = vld [vmem:[%s0 + $0x58] sm:$0xff]
    %v36 = vld [vmem:[%s0 + $0x60] sm:$0xff]
    %v37 = vld [vmem:[%s0 + $0x68] sm:$0xff]
    %v38 = vld [vmem:[%s0 + $0x70] sm:$0xff]
    %v39 = vld [vmem:[%s0 + $0x78] sm:$0xff]
    %v40 = vld [vmem:[%s0 + $0x80] sm:$0xff]
    %v41 = vld [vmem:[%s0 + $0x88] sm:$0xff]
    %v42 = vld [vmem:[%s0 + $0x90] sm:$0xff]
    %v43 = vld [vmem:[%s0 + $0x98] sm:$0xff]
    %v44 = vld [vmem:[%s0 + $0xa0] sm:$0xff]
    %v45 = vld [vmem:[%s0 + $0xa8] sm:$0xff]
    %v46 = vld [vmem:[%s0 + $0xb0] sm:$0xff]
    %v47 = vld [vmem:[%s0 + $0xb8] sm:$0xff]
    %v48 = vld [vmem:[%s0 + $0xc0] sm:$0xff]
    %v49 = vld [vmem:[%s0 + $0xc8] sm:$0xff]
    %v50 = vld [vmem:[%s0 + $0xd0] sm:$0xff]
    %v51 = vld [vmem:[%s0 + $0xd8] sm:$0xff]
    %v52 = vld [vmem:[%s0 + $0xe0] sm:$0xff]
    %v53 = vld [vmem:[%s0 + $0xe8] sm:$0xff]
    %v54 = vld [vmem:[%s0 + $0xf0] sm:$0xff]
    %v55 = vld [vmem:[%s0 + $0xf8] sm:$0xff]
    %v56 = vld [vmem:[%s0 + $0x100] sm:$0xff]
    %v57 = vld [vmem:[%s0 + $0x108] sm:$0xff]
    %v58 = vld [vmem:[%s0 + $0x110] sm:$0xff]
    %v59 = vld [vmem:[%s0 + $0x118] sm:$0xff]
    %v60 = vld [vmem:[%s0 + $0x120] sm:$0xff]
    %v61 = vld [vmem:[%s0 + $0x128] sm:$0xff]
    %v62 = vld [vmem:[%s0 + $0x130] sm:$0xff]
    %v63 = vld [vmem:[%s0 + $0x138] sm:$0xff]
    %v64 = vld [vmem:[%s0 + $0x140] sm:$0xff]
    %v65 = vld [vmem:[%s0 + $0x148] sm:$0xff]
    %v66 = vld [vmem:[%s0 + $0x150] sm:$0xff]
    %v67 = vld [vmem:[%s0 + $0x158] sm:$0xff]
    %v68 = vld [vmem:[%s0 + $0x160] sm:$0xff]
    %v69 = vld [vmem:[%s0 + $0x168] sm:$0xff]
    %v70 = vld [vmem:[%s0 + $0x170] sm:$0xff]
    %v71 = vld [vmem:[%s0 + $0x178] sm:$0xff]
    %v72 = vld [vmem:[%s0 + $0x180] sm:$0xff]
    %v73 = vld [vmem:[%s0 + $0x188] sm:$0xff]
    %v74 = vld [vmem:[%s0 + $0x190] sm:$0xff]
    %v75 = vld [vmem:[%s0 + $0x198] sm:$0xff]
    %v76 = vld [vmem:[%s0 + $0x1a0] sm:$0xff]
    %v77 = vld [vmem:[%s0 + $0x1a8] sm:$0xff]
    %v78 = vld [vmem:[%s0 + $0x1b0] sm:$0xff]
    %v79 = vld [vmem:[%s0 + $0x1b8] sm:$0xff]
    %v80 = vld [vmem:[%s0 + $0x1c0] sm:$0xff]
    %v81 = vld [vmem:[%s0 + $0x1c8] sm:$0xff]
    %v82 = vld [vmem:[%s0 + $0x1d0] sm:$0xff]
    %v83 = vld [vmem:[%s0 + $0x1d8] sm:$0xff]
    %v84 = vld [vmem:[%s0 + $0x1e0] sm:$0xff]
    %v85 = vld [vmem:[%s0 + $0x1e8] sm:$0xff]
    %v86 = vld [vmem:[%s0 + $0x1f0] sm:$0xff]
    %v87 = vld [vmem:[%s0 + $0x1f8] sm:$0xff]
    %v88 = vld [vmem:[%s1] sm:$0xff]
    %v89 = vld [vmem:[%s1 + $0x8] sm:$0xff]
    %v90 = vld [vmem:[%s1 + $0x10] sm:$0xff]
    %v91 = vld [vmem:[%s1 + $0x18] sm:$0xff]
    %v92 = vld [vmem:[%s1 + $0x20] sm:$0xf]
    %v93 = vld [vmem:[%s2] sm:$0x1]
    %v95 = vperm.slane %v93, 0
    %vm97 = vcmask 293888
    %v99 = vsel %vm97, %v24, 0
    %v102 = vsel %vm97, %v25, 0
    %v105 = vsel %vm97, %v26, 0
    %v108 = vsel %vm97, %v27, 0
    %v111 = vsel %vm97, %v28, 0
    %v114 = vsel %vm97, %v29, 0
    %v117 = vsel %vm97, %v30, 0
    %v120 = vsel %vm97, %v31, 0
    %v123 = vsel %vm97, %v32, 0
    %v126 = vsel %vm97, %v33, 0
    %v129 = vsel %vm97, %v34, 0
    %v132 = vsel %vm97, %v35, 0
    %v135 = vsel %vm97, %v36, 0
    %v138 = vsel %vm97, %v37, 0
    %v141 = vsel %vm97, %v38, 0
    %v144 = vsel %vm97, %v39, 0
    %v147 = vsel %vm97, %v40, 0
    %v150 = vsel %vm97, %v41, 0
    %v153 = vsel %vm97, %v42, 0
    %v156 = vsel %vm97, %v43, 0
    %v159 = vsel %vm97, %v44, 0
    %v162 = vsel %vm97, %v45, 0
    %v165 = vsel %vm97, %v46, 0
    %v168 = vsel %vm97, %v47, 0
    %v171 = vsel %vm97, %v48, 0
    %v174 = vsel %vm97, %v49, 0
    %v177 = vsel %vm97, %v50, 0
    %v180 = vsel %vm97, %v51, 0
    %v183 = vsel %vm97, %v52, 0
    %v186 = vsel %vm97, %v53, 0
    %v189 = vsel %vm97, %v54, 0
    %v192 = vsel %vm97, %v55, 0
    %v195 = vsel %vm97, %v56, 0
    %v198 = vsel %vm97, %v57, 0
    %v201 = vsel %vm97, %v58, 0
    %v204 = vsel %vm97, %v59, 0
    %v207 = vsel %vm97, %v60, 0
    %v210 = vsel %vm97, %v61, 0
    %v213 = vsel %vm97, %v62, 0
    %v216 = vsel %vm97, %v63, 0
    %v219 = vsel %vm97, %v64, 0
    %v222 = vsel %vm97, %v65, 0
    %v225 = vsel %vm97, %v66, 0
    %v228 = vsel %vm97, %v67, 0
    %v231 = vsel %vm97, %v68, 0
    %v234 = vsel %vm97, %v69, 0
    %v237 = vsel %vm97, %v70, 0
    %v240 = vsel %vm97, %v71, 0
    %v243 = vsel %vm97, %v72, 0
    %v246 = vsel %vm97, %v73, 0
    %v249 = vsel %vm97, %v74, 0
    %v252 = vsel %vm97, %v75, 0
    %v255 = vsel %vm97, %v76, 0
    %v258 = vsel %vm97, %v77, 0
    %v261 = vsel %vm97, %v78, 0
    %v264 = vsel %vm97, %v79, 0
    %v267 = vsel %vm97, %v80, 0
    %v270 = vsel %vm97, %v81, 0
    %v273 = vsel %vm97, %v82, 0
    %v276 = vsel %vm97, %v83, 0
    %v279 = vsel %vm97, %v84, 0
    %v282 = vsel %vm97, %v85, 0
    %v285 = vsel %vm97, %v86, 0
    %v288 = vsel %vm97, %v87, 0
    %vm290 = vcmask 1043456
    %v292 = vsel %vm290, %v92, 0
    %294 = vmatpush.msra.mxu0 0.0
    %295 = vmatpush.msra.mxu0 0.0
    %296 = vmatpush.msra.mxu0 0.0
    %297 = vmatpush.msra.mxu0 0.0
    %298 = vmatpush.msra.mxu0 0.0
    %299 = vmatpush.msra.mxu0 0.0
    %300 = vmatpush.msra.mxu0 0.0
    %301 = vmatpush.msra.mxu0 0.0
    %302 = vmatpush.msra.mxu0 0.0
    %303 = vmatpush.msra.mxu0 0.0
    %304 = vmatpush.msra.mxu0 0.0
    %305 = vmatpush.msra.mxu0 %v292
    %306 = vmatpush.msra.mxu0 %v91
    %307 = vmatpush.msra.mxu0 %v90
    %308 = vmatpush.msra.mxu0 %v89
    %309 = vmatpush.msra.mxu0 %v88
    %310 = vmatmul.f32.gmra.mxu0 %v99
    %v311 = vpop.f32.mrf.mxu0
    %v312 = vadd.f32 %v95, %v311
    %313 = vmatmul.f32.gmra.mxu0 %v102
    %v314 = vpop.f32.mrf.mxu0
    %v315 = vadd.f32 %v95, %v314
    %316 = vmatmul.f32.gmra.mxu0 %v105
    %v317 = vpop.f32.mrf.mxu0
    %v318 = vadd.f32 %v95, %v317
    %319 = vmatmul.f32.gmra.mxu0 %v108
    %v320 = vpop.f32.mrf.mxu0
    %v321 = vadd.f32 %v95, %v320
    %322 = vmatmul.f32.gmra.mxu0 %v111
    %v323 = vpop.f32.mrf.mxu0
    %v324 = vadd.f32 %v95, %v323
    %325 = vmatmul.f32.gmra.mxu0 %v114
    %v326 = vpop.f32.mrf.mxu0
    %v327 = vadd.f32 %v95, %v326
    %328 = vmatmul.f32.gmra.mxu0 %v117
    %v329 = vpop.f32.mrf.mxu0
    %v330 = vadd.f32 %v95, %v329
    %331 = vmatmul.f32.gmra.mxu0 %v120
    %v332 = vpop.f32.mrf.mxu0
    %v333 = vadd.f32 %v95, %v332
    %334 = vmatmul.f32.gmra.mxu0 %v123
    %v335 = vpop.f32.mrf.mxu0
    %v336 = vadd.f32 %v95, %v335
    %337 = vmatmul.f32.gmra.mxu0 %v126
    %v338 = vpop.f32.mrf.mxu0
    %v339 = vadd.f32 %v95, %v338
    %340 = vmatmul.f32.gmra.mxu0 %v129
    %v341 = vpop.f32.mrf.mxu0
    %v342 = vadd.f32 %v95, %v341
    %343 = vmatmul.f32.gmra.mxu0 %v132
    %v344 = vpop.f32.mrf.mxu0
    %v345 = vadd.f32 %v95, %v344
    %346 = vmatmul.f32.gmra.mxu0 %v135
    %v347 = vpop.f32.mrf.mxu0
    %v348 = vadd.f32 %v95, %v347
    %349 = vmatmul.f32.gmra.mxu0 %v138
    %v350 = vpop.f32.mrf.mxu0
    %v351 = vadd.f32 %v95, %v350
    %352 = vmatmul.f32.gmra.mxu0 %v141
    %v353 = vpop.f32.mrf.mxu0
    %v354 = vadd.f32 %v95, %v353
    %355 = vmatmul.f32.gmra.mxu0 %v144
    %v356 = vpop.f32.mrf.mxu0
    %v357 = vadd.f32 %v95, %v356
    %358 = vmatmul.f32.gmra.mxu0 %v147
    %v359 = vpop.f32.mrf.mxu0
    %v360 = vadd.f32 %v95, %v359
    %361 = vmatmul.f32.gmra.mxu0 %v150
    %v362 = vpop.f32.mrf.mxu0
    %v363 = vadd.f32 %v95, %v362
    %364 = vmatmul.f32.gmra.mxu0 %v153
    %v365 = vpop.f32.mrf.mxu0
    %v366 = vadd.f32 %v95, %v365
    %367 = vmatmul.f32.gmra.mxu0 %v156
    %v368 = vpop.f32.mrf.mxu0
    %v369 = vadd.f32 %v95, %v368
    %370 = vmatmul.f32.gmra.mxu0 %v159
    %v371 = vpop.f32.mrf.mxu0
    %v372 = vadd.f32 %v95, %v371
    %373 = vmatmul.f32.gmra.mxu0 %v162
    %v374 = vpop.f32.mrf.mxu0
    %v375 = vadd.f32 %v95, %v374
    %376 = vmatmul.f32.gmra.mxu0 %v165
    %v377 = vpop.f32.mrf.mxu0
    %v378 = vadd.f32 %v95, %v377
    %379 = vmatmul.f32.gmra.mxu0 %v168
    %v380 = vpop.f32.mrf.mxu0
    %v381 = vadd.f32 %v95, %v380
    %382 = vmatmul.f32.gmra.mxu0 %v171
    %v383 = vpop.f32.mrf.mxu0
    %v384 = vadd.f32 %v95, %v383
    %385 = vmatmul.f32.gmra.mxu0 %v174
    %v386 = vpop.f32.mrf.mxu0
    %v387 = vadd.f32 %v95, %v386
    %388 = vmatmul.f32.gmra.mxu0 %v177
    %v389 = vpop.f32.mrf.mxu0
    %v390 = vadd.f32 %v95, %v389
    %391 = vmatmul.f32.gmra.mxu0 %v180
    %v392 = vpop.f32.mrf.mxu0
    %v393 = vadd.f32 %v95, %v392
    %394 = vmatmul.f32.gmra.mxu0 %v183
    %v395 = vpop.f32.mrf.mxu0
    %v396 = vadd.f32 %v95, %v395
    %397 = vmatmul.f32.gmra.mxu0 %v186
    %v398 = vpop.f32.mrf.mxu0
    %v399 = vadd.f32 %v95, %v398
    %400 = vmatmul.f32.gmra.mxu0 %v189
    %v401 = vpop.f32.mrf.mxu0
    %v402 = vadd.f32 %v95, %v401
    %403 = vmatmul.f32.gmra.mxu0 %v192
    %v404 = vpop.f32.mrf.mxu0
    %v405 = vadd.f32 %v95, %v404
    %406 = vmatmul.f32.gmra.mxu0 %v195
    %v407 = vpop.f32.mrf.mxu0
    %v408 = vadd.f32 %v95, %v407
    %409 = vmatmul.f32.gmra.mxu0 %v198
    %v410 = vpop.f32.mrf.mxu0
    %v411 = vadd.f32 %v95, %v410
    %412 = vmatmul.f32.gmra.mxu0 %v201
    %v413 = vpop.f32.mrf.mxu0
    %v414 = vadd.f32 %v95, %v413
    %415 = vmatmul.f32.gmra.mxu0 %v204
    %v416 = vpop.f32.mrf.mxu0
    %v417 = vadd.f32 %v95, %v416
    %418 = vmatmul.f32.gmra.mxu0 %v207
    %v419 = vpop.f32.mrf.mxu0
    %v420 = vadd.f32 %v95, %v419
    %421 = vmatmul.f32.gmra.mxu0 %v210
    %v422 = vpop.f32.mrf.mxu0
    %v423 = vadd.f32 %v95, %v422
    %424 = vmatmul.f32.gmra.mxu0 %v213
    %v425 = vpop.f32.mrf.mxu0
    %v426 = vadd.f32 %v95, %v425
    %427 = vmatmul.f32.gmra.mxu0 %v216
    %v428 = vpop.f32.mrf.mxu0
    %v429 = vadd.f32 %v95, %v428
    %430 = vmatmul.f32.gmra.mxu0 %v219
    %v431 = vpop.f32.mrf.mxu0
    %v432 = vadd.f32 %v95, %v431
    %433 = vmatmul.f32.gmra.mxu0 %v222
    %v434 = vpop.f32.mrf.mxu0
    %v435 = vadd.f32 %v95, %v434
    %436 = vmatmul.f32.gmra.mxu0 %v225
    %v437 = vpop.f32.mrf.mxu0
    %v438 = vadd.f32 %v95, %v437
    %439 = vmatmul.f32.gmra.mxu0 %v228
    %v440 = vpop.f32.mrf.mxu0
    %v441 = vadd.f32 %v95, %v440
    %442 = vmatmul.f32.gmra.mxu0 %v231
    %v443 = vpop.f32.mrf.mxu0
    %v444 = vadd.f32 %v95, %v443
    %445 = vmatmul.f32.gmra.mxu0 %v234
    %v446 = vpop.f32.mrf.mxu0
    %v447 = vadd.f32 %v95, %v446
    %448 = vmatmul.f32.gmra.mxu0 %v237
    %v449 = vpop.f32.mrf.mxu0
    %v450 = vadd.f32 %v95, %v449
    %451 = vmatmul.f32.gmra.mxu0 %v240
    %v452 = vpop.f32.mrf.mxu0
    %v453 = vadd.f32 %v95, %v452
    %454 = vmatmul.f32.gmra.mxu0 %v243
    %v455 = vpop.f32.mrf.mxu0
    %v456 = vadd.f32 %v95, %v455
    %457 = vmatmul.f32.gmra.mxu0 %v246
    %v458 = vpop.f32.mrf.mxu0
    %v459 = vadd.f32 %v95, %v458
    %460 = vmatmul.f32.gmra.mxu0 %v249
    %v461 = vpop.f32.mrf.mxu0
    %v462 = vadd.f32 %v95, %v461
    %463 = vmatmul.f32.gmra.mxu0 %v252
    %v464 = vpop.f32.mrf.mxu0
    %v465 = vadd.f32 %v95, %v464
    %466 = vmatmul.f32.gmra.mxu0 %v255
    %v467 = vpop.f32.mrf.mxu0
    %v468 = vadd.f32 %v95, %v467
    %469 = vmatmul.f32.gmra.mxu0 %v258
    %v470 = vpop.f32.mrf.mxu0
    %v471 = vadd.f32 %v95, %v470
    %472 = vmatmul.f32.gmra.mxu0 %v261
    %v473 = vpop.f32.mrf.mxu0
    %v474 = vadd.f32 %v95, %v473
    %475 = vmatmul.f32.gmra.mxu0 %v264
    %v476 = vpop.f32.mrf.mxu0
    %v477 = vadd.f32 %v95, %v476
    %478 = vmatmul.f32.gmra.mxu0 %v267
    %v479 = vpop.f32.mrf.mxu0
    %v480 = vadd.f32 %v95, %v479
    %481 = vmatmul.f32.gmra.mxu0 %v270
    %v482 = vpop.f32.mrf.mxu0
    %v483 = vadd.f32 %v95, %v482
    %484 = vmatmul.f32.gmra.mxu0 %v273
    %v485 = vpop.f32.mrf.mxu0
    %v486 = vadd.f32 %v95, %v485
    %487 = vmatmul.f32.gmra.mxu0 %v276
    %v488 = vpop.f32.mrf.mxu0
    %v489 = vadd.f32 %v95, %v488
    %490 = vmatmul.f32.gmra.mxu0 %v279
    %v491 = vpop.f32.mrf.mxu0
    %v492 = vadd.f32 %v95, %v491
    %493 = vmatmul.f32.gmra.mxu0 %v282
    %v494 = vpop.f32.mrf.mxu0
    %v495 = vadd.f32 %v95, %v494
    %496 = vmatmul.f32.gmra.mxu0 %v285
    %v497 = vpop.f32.mrf.mxu0
    %v498 = vadd.f32 %v95, %v497
    %499 = vmatmul.f32.gmra.mxu0 %v288
    %v500 = vpop.f32.mrf.mxu0
    %v501 = vadd.f32 %v95, %v500
    %502 = vdwg.mxu0
    %v503 = vmax.f32 %v312, 0.0
    %v504 = vmax.f32 %v315, 0.0
    %v505 = vmax.f32 %v318, 0.0
    %v506 = vmax.f32 %v321, 0.0
    %v507 = vmax.f32 %v324, 0.0
    %v508 = vmax.f32 %v327, 0.0
    %v509 = vmax.f32 %v330, 0.0
    %v510 = vmax.f32 %v333, 0.0
    %v511 = vmax.f32 %v336, 0.0
    %v512 = vmax.f32 %v339, 0.0
    %v513 = vmax.f32 %v342, 0.0
    %v514 = vmax.f32 %v345, 0.0
    %v515 = vmax.f32 %v348, 0.0
    %v516 = vmax.f32 %v351, 0.0
    %v517 = vmax.f32 %v354, 0.0
    %v518 = vmax.f32 %v357, 0.0
    %v519 = vmax.f32 %v360, 0.0
    %v520 = vmax.f32 %v363, 0.0
    %v521 = vmax.f32 %v366, 0.0
    %v522 = vmax.f32 %v369, 0.0
    %v523 = vmax.f32 %v372, 0.0
    %v524 = vmax.f32 %v375, 0.0
    %v525 = vmax.f32 %v378, 0.0
    %v526 = vmax.f32 %v381, 0.0
    %v527 = vmax.f32 %v384, 0.0
    %v528 = vmax.f32 %v387, 0.0
    %v529 = vmax.f32 %v390, 0.0
    %v530 = vmax.f32 %v393, 0.0
    %v531 = vmax.f32 %v396, 0.0
    %v532 = vmax.f32 %v399, 0.0
    %v533 = vmax.f32 %v402, 0.0
    %v534 = vmax.f32 %v405, 0.0
    %v535 = vmax.f32 %v408, 0.0
    %v536 = vmax.f32 %v411, 0.0
    %v537 = vmax.f32 %v414, 0.0
    %v538 = vmax.f32 %v417, 0.0
    %v539 = vmax.f32 %v420, 0.0
    %v540 = vmax.f32 %v423, 0.0
    %v541 = vmax.f32 %v426, 0.0
    %v542 = vmax.f32 %v429, 0.0
    %v543 = vmax.f32 %v432, 0.0
    %v544 = vmax.f32 %v435, 0.0
    %v545 = vmax.f32 %v438, 0.0
    %v546 = vmax.f32 %v441, 0.0
    %v547 = vmax.f32 %v444, 0.0
    %v548 = vmax.f32 %v447, 0.0
    %v549 = vmax.f32 %v450, 0.0
    %v550 = vmax.f32 %v453, 0.0
    %v551 = vmax.f32 %v456, 0.0
    %v552 = vmax.f32 %v459, 0.0
    %v553 = vmax.f32 %v462, 0.0
    %v554 = vmax.f32 %v465, 0.0
    %v555 = vmax.f32 %v468, 0.0
    %v556 = vmax.f32 %v471, 0.0
    %v557 = vmax.f32 %v474, 0.0
    %v558 = vmax.f32 %v477, 0.0
    %v559 = vmax.f32 %v480, 0.0
    %v560 = vmax.f32 %v483, 0.0
    %v561 = vmax.f32 %v486, 0.0
    %v562 = vmax.f32 %v489, 0.0
    %v563 = vmax.f32 %v492, 0.0
    %v564 = vmax.f32 %v495, 0.0
    %v565 = vmax.f32 %v498, 0.0
    %v566 = vmax.f32 %v501, 0.0
    %v567 = vld [vmem:[%s3] sm:$0xff]
    %569 = vst [vmem:[#allocation1] ss:$4 sm:$0xff] %v567
    %v570 = vld.sshfl [vmem:[#allocation1] sm:$0xff pattern:$0x73625140]
    %v571 = vld.sshfl [vmem:[#allocation1 + $0x8] sm:$0xff pattern:$0x73625140]
    %v572 = vld.sshfl [vmem:[#allocation1 + $0x10] sm:$0xff pattern:$0x73625140]
    %v573 = vld.sshfl [vmem:[#allocation1 + $0x18] sm:$0xff pattern:$0x73625140]
    %578 = vmatpush.msra.mxu0 %v518
    %579 = vmatpush.msra.mxu0 %v517
    %580 = vmatpush.msra.mxu0 %v516
    %581 = vmatpush.msra.mxu0 %v515
    %582 = vmatpush.msra.mxu0 %v514
    %583 = vmatpush.msra.mxu0 %v513
    %584 = vmatpush.msra.mxu0 %v512
    %585 = vmatpush.msra.mxu0 %v511
    %586 = vmatpush.msra.mxu0 %v510
    %587 = vmatpush.msra.mxu0 %v509
    %588 = vmatpush.msra.mxu0 %v508
    %589 = vmatpush.msra.mxu0 %v507
    %590 = vmatpush.msra.mxu0 %v506
    %591 = vmatpush.msra.mxu0 %v505
    %592 = vmatpush.msra.mxu0 %v504
    %593 = vmatpush.msra.mxu0 %v503
    %594 = vmatmul.f32.gmra.mxu0 %v570
    %v595 = vpop.f32.mrf.mxu0
    %v596 = vadd.f32 0.0, %v595
    %597 = vdwg.mxu0
    %598 = vmatpush.msra.mxu0 %v534
    %599 = vmatpush.msra.mxu0 %v533
    %600 = vmatpush.msra.mxu0 %v532
    %601 = vmatpush.msra.mxu0 %v531
    %602 = vmatpush.msra.mxu0 %v530
    %603 = vmatpush.msra.mxu0 %v529
    %604 = vmatpush.msra.mxu0 %v528
    %605 = vmatpush.msra.mxu0 %v527
    %606 = vmatpush.msra.mxu0 %v526
    %607 = vmatpush.msra.mxu0 %v525
    %608 = vmatpush.msra.mxu0 %v524
    %609 = vmatpush.msra.mxu0 %v523
    %610 = vmatpush.msra.mxu0 %v522
    %611 = vmatpush.msra.mxu0 %v521
    %612 = vmatpush.msra.mxu0 %v520
    %613 = vmatpush.msra.mxu0 %v519
    %614 = vmatmul.f32.gmra.mxu0 %v571
    %v615 = vpop.f32.mrf.mxu0
    %v616 = vadd.f32 %v596, %v615
    %617 = vdwg.mxu0
    %618 = vmatpush.msra.mxu0 %v550
    %619 = vmatpush.msra.mxu0 %v549
    %620 = vmatpush.msra.mxu0 %v548
    %621 = vmatpush.msra.mxu0 %v547
    %622 = vmatpush.msra.mxu0 %v546
    %623 = vmatpush.msra.mxu0 %v545
    %624 = vmatpush.msra.mxu0 %v544
    %625 = vmatpush.msra.mxu0 %v543
    %626 = vmatpush.msra.mxu0 %v542
    %627 = vmatpush.msra.mxu0 %v541
    %628 = vmatpush.msra.mxu0 %v540
    %629 = vmatpush.msra.mxu0 %v539
    %630 = vmatpush.msra.mxu0 %v538
    %631 = vmatpush.msra.mxu0 %v537
    %632 = vmatpush.msra.mxu0 %v536
    %633 = vmatpush.msra.mxu0 %v535
    %634 = vmatmul.f32.gmra.mxu0 %v572
    %v635 = vpop.f32.mrf.mxu0
    %v636 = vadd.f32 %v616, %v635
    %637 = vdwg.mxu0
    %638 = vmatpush.msra.mxu0 %v566
    %639 = vmatpush.msra.mxu0 %v565
    %640 = vmatpush.msra.mxu0 %v564
    %641 = vmatpush.msra.mxu0 %v563
    %642 = vmatpush.msra.mxu0 %v562
    %643 = vmatpush.msra.mxu0 %v561
    %644 = vmatpush.msra.mxu0 %v560
    %645 = vmatpush.msra.mxu0 %v559
    %646 = vmatpush.msra.mxu0 %v558
    %647 = vmatpush.msra.mxu0 %v557
    %648 = vmatpush.msra.mxu0 %v556
    %649 = vmatpush.msra.mxu0 %v555
    %650 = vmatpush.msra.mxu0 %v554
    %651 = vmatpush.msra.mxu0 %v553
    %652 = vmatpush.msra.mxu0 %v552
    %653 = vmatpush.msra.mxu0 %v551
    %654 = vmatmul.f32.gmra.mxu0 %v573
    %v655 = vpop.f32.mrf.mxu0
    %v656 = vadd.f32 %v636, %v655
    %657 = vdwg.mxu0
    %v658 = vld [vmem:[%s4] sm:$0xff]
    %v659 = vld [vmem:[%s4 + $0x8] sm:$0xff]
    %v660 = vld [vmem:[%s4 + $0x10] sm:$0xff]
    %v661 = vld [vmem:[%s4 + $0x18] sm:$0xff]
    %v662 = vld [vmem:[%s4 + $0x20] sm:$0xff]
    %v663 = vld [vmem:[%s4 + $0x28] sm:$0xff]
    %v664 = vld [vmem:[%s4 + $0x30] sm:$0xff]
    %v665 = vld [vmem:[%s4 + $0x38] sm:$0xff]
    %v666 = vld [vmem:[%s4 + $0x40] sm:$0xff]
    %v667 = vld [vmem:[%s4 + $0x48] sm:$0xff]
    %v668 = vld [vmem:[%s4 + $0x50] sm:$0xff]
    %v669 = vld [vmem:[%s4 + $0x58] sm:$0xff]
    %v670 = vld [vmem:[%s4 + $0x60] sm:$0xff]
    %v671 = vld [vmem:[%s4 + $0x68] sm:$0xff]
    %v672 = vld [vmem:[%s4 + $0x70] sm:$0xff]
    %v673 = vld [vmem:[%s4 + $0x78] sm:$0xff]
    %v674 = vld [vmem:[%s5] sm:$0x1]
    %v676 = vperm.slane %v674, 0
    %678 = vmatpush.msra.mxu0 %v673
    %679 = vmatpush.msra.mxu0 %v672
    %680 = vmatpush.msra.mxu0 %v671
    %681 = vmatpush.msra.mxu0 %v670
    %682 = vmatpush.msra.mxu0 %v669
    %683 = vmatpush.msra.mxu0 %v668
    %684 = vmatpush.msra.mxu0 %v667
    %685 = vmatpush.msra.mxu0 %v666
    %686 = vmatpush.msra.mxu0 %v665
    %687 = vmatpush.msra.mxu0 %v664
    %688 = vmatpush.msra.mxu0 %v663
    %689 = vmatpush.msra.mxu0 %v662
    %690 = vmatpush.msra.mxu0 %v661
    %691 = vmatpush.msra.mxu0 %v660
    %692 = vmatpush.msra.mxu0 %v659
    %693 = vmatpush.msra.mxu0 %v658
    %694 = vmatmul.f32.gmra.mxu0 %v656
    %v695 = vpop.f32.mrf.mxu0
    %v696 = vadd.f32 %v676, %v695
    %697 = vdwg.mxu0
    %698 = vst [vmem:[#allocation2] sm:$0x3] %v696
    // Predicated region
    $region26: #{tpu_custom_call.1} parent=1 // pred_check
      _
    $region27: #{tpu_custom_call.1} parent=1 // pred_check_branch
      %700 = sbr.rel (0) target = $region29
    $region28: #{tpu_custom_call.1} parent=1 // pred_region
      %702 = vsyncadd [#allocation3], 0
      %s704 = sshll.u32 [#allocation2], 4
      %s705 = int_to_ptr.vmem [resolvable:$true] %s704
      %s706 = sshll.u32 %s6, 4
      %s707 = int_to_ptr.hbm [resolvable:$true] %s706
      %709 = dma.vmem_to_hbm [thread:$0]  %s705, 32, %s707, [#allocation3]
    $region29: #{tpu_custom_call.1} parent=1 // pred_fallthru
      _
    // Predicated region
    $region30: #{tpu_custom_call.1} parent=1 // pred_check
      _
    $region31: #{tpu_custom_call.1} parent=1 // pred_check_branch
      %711 = sbr.rel (0) target = $region33
    $region32: #{tpu_custom_call.1} parent=1 // pred_region
      %713 = dma.done [#allocation3], 32
    $region33: #{tpu_custom_call.1} parent=1 // pred_fallthru
      _
    %714 = vsyncpa [#allocation3], 1

</llo_original>
